<compile_context>
chip_gen: v7x
topology: tpu7x:2x2x1
jax: 0.10.0
libtpu: 0.0.40
codegen_flags: <defaults>
</compile_context>

<pallas_src>
import jax
import jax.numpy as jnp
from jax.experimental import pallas as pl
from jax.experimental.pallas import tpu as pltpu


def _broadcast_kernel(x_ref, o_ref):
    # x_ref: (tN, 1, tH, W) gray block; o_ref: (tN, 3, tH, W).
    # The channel dim is a leading (non-sublane/lane) dim, so this broadcast is
    # just three dense stores of the same vregs at different channel offsets.
    o_ref[...] = jnp.broadcast_to(x_ref[...], o_ref.shape)


def _round_up(x, m):
    return (x + m - 1) // m * m


def grayscale_to_rgb(x):
    """Equivalent of nn_GrayScaleToRGB.forward (NCHW layout)."""
    N, C, H, W = x.shape
    if C != 1:
        # PyTorch module returns the input unchanged when channels != 1.
        return x

    dsize = jnp.dtype(x.dtype).itemsize
    # Dtype-aware sublane packing: f32 -> 8 rows/vreg, bf16 -> 16, int8/fp8 -> 32.
    sublane = {4: 8, 2: 16, 1: 32}.get(dsize, 8)

    # Padded extents of the last two (sublane, lane) block dims, as Mosaic will
    # actually allocate them in VMEM / tile them in HBM.
    w_pad = max(_round_up(W, 128), 128)
    h_pad = _round_up(H, sublane)

    # VMEM budget for the double-buffered (1 input + 3 output channel) blocks.
    # ~8 MiB stays safely under v5e's 16 MiB scoped default and v7x's 32 MiB
    # scoped default / 64 MiB physical per TensorCore; v6e has ample headroom.
    budget = 8 * 1024 * 1024
    bytes_per_row = 4 * w_pad * dsize * 2  # (1 in + 3 out) channels, x2 buffers
    max_rows = max(sublane, (budget // bytes_per_row) // sublane * sublane)

    if h_pad <= max_rows:
        # Whole plane fits in one block: keep full H (always a legal block dim)
        # and fold several batch elements per grid step so each step moves a
        # decent chunk of HBM traffic (amortizes the ~0.35 us/step overhead).
        tile_h = H
        tile_n = max(1, min(N, max_rows // h_pad))
        if N >= 2:
            # Keep >= 2 grid steps so v7x can split the copy across its 2 TCs.
            tile_n = min(tile_n, (N + 1) // 2)
    else:
        # Large plane: one batch element per step, tile H in sublane-aligned
        # chunks (a multiple of 8 satisfies the (8, 128) block constraint).
        tile_n = 1
        tile_h = min(H, max_rows)

    grid = (pl.cdiv(N, tile_n), pl.cdiv(H, tile_h))

    out = pl.pallas_call(
        _broadcast_kernel,
        out_shape=jax.ShapeDtypeStruct((N, 3, H, W), x.dtype),
        grid_spec=pltpu.PrefetchScalarGridSpec(
            num_scalar_prefetch=0,
            grid=grid,
            in_specs=[
                # Native 4D layout: channel dim (size 1) stays out of the
                # sublane position; last two block dims are (tile_h, W).
                pl.BlockSpec((tile_n, 1, tile_h, W), lambda b, h: (b, 0, h, 0)),
            ],
            out_specs=pl.BlockSpec((tile_n, 3, tile_h, W), lambda b, h: (b, 0, h, 0)),
        ),
        compiler_params=pltpu.CompilerParams(
            dimension_semantics=("parallel", "parallel"),
        ),
        cost_estimate=pl.CostEstimate(
            flops=0,
            transcendentals=0,
            bytes_accessed=4 * N * H * W * dsize,  # 1 plane read + 3 plane writes
        ),
    )(x)

    return out


if __name__ == "__main__":
    key = jax.random.PRNGKey(0)

    # Grayscale input: batch=2, channels=1, spatial=16x16.
    x = jax.random.normal(key, (2, 1, 16, 16), dtype=jnp.float32)
    y = jax.block_until_ready(grayscale_to_rgb(x))
    assert y.shape == (2, 3, 16, 16), y.shape
    assert y.dtype == x.dtype
    assert jnp.array_equal(y, jnp.broadcast_to(x, (2, 3, 16, 16))), "mismatch vs broadcast reference"

    # Pass-through case (C != 1) — returns input unchanged.
    x3 = jax.random.normal(jax.random.PRNGKey(1), (2, 3, 16, 16), dtype=jnp.float32)
    y3 = jax.block_until_ready(grayscale_to_rgb(x3))
    assert jnp.array_equal(y3, x3)

    # Odd plane size (H not a multiple of 8, W not a multiple of 128) exercises
    # the full-dim block path.
    x_odd = jax.random.normal(jax.random.PRNGKey(2), (2, 1, 9, 12), dtype=jnp.float32)
    y_odd = jax.block_until_ready(grayscale_to_rgb(x_odd))
    assert jnp.array_equal(y_odd, jnp.broadcast_to(x_odd, (2, 3, 9, 12)))

    # bf16 input exercises the dtype-aware sublane choice and batch folding.
    x_bf = jax.random.normal(jax.random.PRNGKey(3), (4, 1, 16, 16), dtype=jnp.bfloat16)
    y_bf = jax.block_until_ready(grayscale_to_rgb(x_bf))
    assert jnp.array_equal(y_bf, jnp.broadcast_to(x_bf, (4, 3, 16, 16)))

    print("KERNEL_OK")
</pallas_src>

<mosaic_0001>
module attributes {stable_mosaic.version = 11 : i64} {
  func.func @_broadcast_kernel(%arg0: i32, %arg1: i32, %arg2: memref<1x1x16x16xf32, #tpu.memory_space<vmem>>, %arg3: memref<1x3x16x16xf32, #tpu.memory_space<vmem>>) attributes {dimension_semantics = [#tpu.dimension_semantics<parallel>, #tpu.dimension_semantics<parallel>], iteration_bounds = array<i64: 2, 1>, scalar_prefetch = 0 : i64, scratch_operands = 0 : i64, tpu.core_type = #tpu.core_type<tc>, window_params = [{transform_indices = @transform_0, window_bounds = array<i64: 1, 1, 16, 16>}, {transform_indices = @transform_1, window_bounds = array<i64: 1, 3, 16, 16>}]} {
    %c0 = arith.constant 0 : index
    %c0_0 = arith.constant 0 : index
    %c0_1 = arith.constant 0 : index
    %c0_2 = arith.constant 0 : index
    %0 = vector.load %arg2[%c0, %c0_0, %c0_1, %c0_2] : memref<1x1x16x16xf32, #tpu.memory_space<vmem>>, vector<1x1x16x16xf32>
    %1 = vector.shape_cast %0 : vector<1x1x16x16xf32> to vector<1x1x16x16xf32>
    %2 = vector.broadcast %1 : vector<1x1x16x16xf32> to vector<1x3x16x16xf32>
    %c0_3 = arith.constant 0 : index
    %c0_4 = arith.constant 0 : index
    %c0_5 = arith.constant 0 : index
    %c0_6 = arith.constant 0 : index
    %3 = vector.load %arg3[%c0_3, %c0_4, %c0_5, %c0_6] : memref<1x3x16x16xf32, #tpu.memory_space<vmem>>, vector<1x3x16x16xf32>
    tpu.vector_store %arg3[%c0_3, %c0_4, %c0_5, %c0_6], %2 {strides = array<i32>} : memref<1x3x16x16xf32, #tpu.memory_space<vmem>>, vector<1x3x16x16xf32>,
    return
  }
  func.func @transform_0(%arg0: i32, %arg1: i32) -> (i32, i32, i32, i32) {
    %c0_i32 = arith.constant 0 : i32
    %c0_i32_0 = arith.constant 0 : i32
    %c0_i32_1 = arith.constant 0 : i32
    return %arg0, %c0_i32, %arg1, %c0_i32_0 : i32, i32, i32, i32
  }
  func.func @transform_1(%arg0: i32, %arg1: i32) -> (i32, i32, i32, i32) {
    %c0_i32 = arith.constant 0 : i32
    %c0_i32_0 = arith.constant 0 : i32
    %c0_i32_1 = arith.constant 0 : i32
    return %arg0, %c0_i32, %arg1, %c0_i32_0 : i32, i32, i32, i32
  }
}

</mosaic_0001>

<llo_original>
// kernel: tpu_custom_call.1
$region0: #{tpu_custom_call.1}
  #allocation0 [shape = 'u32[]', space=smem, size = 0x4, offset = 0x4, fixed_abs, tag = 'smem constant byte address 0x4 - core index']
  #allocation1 [shape = 'u32[144,128]{1,0:T(1,128)}', space=vmem, size = 0x12000, scoped, tag = 'internal scratch']
  %s0 = inlined_call_operand.hbm [shape: f32[2,1,16,16], index: 0, kind: input, shape index: {}]
  %s1 = inlined_call_operand.hbm [shape: f32[2,3,16,16], index: 1, kind: output, shape index: {}]
  %s2 = sld [smem:[#allocation0]]
  $region41: #{tpu_custom_call.1} parent=0
    _
  %s4 = ssub.s32 1, %s2
  %s5 = scalar_select 0, %s4, %s2
  $region1: #{tpu_custom_call.1} parent=0
    #allocation2 [shape = 'u8[16384]{0}', space=vmem, size = 0x4000, scoped, tag = 'input window, operand 0']
    #allocation3 [shape = 's32[2]{0}', space=sflag, size = 0x8, scoped, tag = 'scoped memory for tpu_custom_call.1']
    #allocation4 [shape = 's32[2]{0}', space=sflag, size = 0x8, scoped, tag = 'scoped memory for tpu_custom_call.1']
    #allocation5 [shape = 'u8[49152]{0}', space=vmem, size = 0xc000, scoped, tag = 'output window, operand 0']
    %6 = vsyncpa [#allocation3], 0
    %s7 = scalar_lea.sflag [#allocation3], 1
    %8 = vsyncpa %s7, 0
    %9 = vsyncpa [#allocation4], 0
    %s10 = scalar_lea.sflag [#allocation4], 1
    %11 = vsyncpa %s10, 0
    loop: start=0, step=1, limit=4
    $region2: #{tpu_custom_call.1} parent=1 // loop_pre_header
      _
    $region3: #{tpu_custom_call.1} parent=1 // loop_header
      %s13 = sphi 0, %s17
      %p14 = scmp.ge.s32.totalorder %s13, 4
      %s20 = sphi 0, %s32
      %s21 = sphi 0, %s28
      %s22 = sphi 0, %s20
      %s23 = sphi 0, %s21
      %s24 = sphi 0, %s22
      %s25 = sphi 0, %s23
      %s37 = sphi 0, %s39
      %s40 = sphi 0, %s37
      %s41 = sphi 0, %s40
      %s57 = sphi 0, %s41
      %s65 = sphi 0, %s67
      %s68 = sphi 0, %s65
      %s69 = sphi 0, %s68
      %s85 = sphi 0, %s69
    $region4: #{tpu_custom_call.1} parent=1 // loop_header_branch
      %16 = sbr.rel (%p14) target = $region8
    $region5: #{tpu_custom_call.1} parent=1 // loop_body
      %s18 = ssub.s32 %s13, 1
      %s19 = ssub.s32 %s13, 2
      %s26 = sadd.s32 1, %s21
      %p27 = scmp.ge.s32.totalorder %s26, 1
      %s28 = scalar_select %p27, 0, %s26
      %s29 = sadd.s32 1, %s20
      %s30 = scalar_select %p27, %s29, %s20
      %p31 = scmp.ge.s32.totalorder %s30, 2
      %s32 = scalar_select %p31, 0, %s30
      %s33 = ssub.s32 %s20, %s32
      %s34 = ssub.s32 %s21, %s28
      %s35 = sor.u32 %s33, %s34
      %p36 = scmp.eq.s32.totalorder %s35, 0
      %s38 = sadd.s32 %s37, 1
      %s39 = scalar_select %p36, %s37, %s38
      %p42 = pneg %p36
      %p43 = scmp.eq.s32.totalorder %s13, 1
      %p44 = por %p42, %p43
      %p45 = scmp.ne.s32.totalorder %s37, %s40
      %p46 = scmp.eq.s32.totalorder %s13, 0
      %p47 = por %p45, %p46
      %p48 = scmp.ne.s32.totalorder %s37, %s40
      %p49 = scmp.eq.s32.totalorder %s18, 1
      %p50 = por %p48, %p49
      %p51 = scmp.ne.s32.totalorder %s40, %s41
      %p52 = scmp.eq.s32.totalorder %s18, 0
      %p53 = por %p51, %p52
      %p54 = scmp.ne.s32.totalorder %s40, %s41
      %p55 = scmp.eq.s32.totalorder %s19, 1
      %p56 = por %p54, %p55
      %p58 = scmp.ne.s32.totalorder %s41, %s57
      %p59 = scmp.eq.s32.totalorder %s19, 0
      %p60 = por %p58, %p59
      %s61 = ssub.s32 %s20, %s32
      %s62 = ssub.s32 %s21, %s28
      %s63 = sor.u32 %s61, %s62
      %p64 = scmp.eq.s32.totalorder %s63, 0
      %s66 = sadd.s32 %s65, 1
      %s67 = scalar_select %p64, %s65, %s66
      %p70 = pneg %p64
      %p71 = scmp.eq.s32.totalorder %s13, 1
      %p72 = por %p70, %p71
      %p73 = scmp.ne.s32.totalorder %s65, %s68
      %p74 = scmp.eq.s32.totalorder %s13, 0
      %p75 = por %p73, %p74
      %p76 = scmp.ne.s32.totalorder %s65, %s68
      %p77 = scmp.eq.s32.totalorder %s18, 1
      %p78 = por %p76, %p77
      %p79 = scmp.ne.s32.totalorder %s68, %s69
      %p80 = scmp.eq.s32.totalorder %s18, 0
      %p81 = por %p79, %p80
      %p82 = scmp.ne.s32.totalorder %s68, %s69
      %p83 = scmp.eq.s32.totalorder %s19, 1
      %p84 = por %p82, %p83
      %p86 = scmp.ne.s32.totalorder %s69, %s85
      %p87 = scmp.eq.s32.totalorder %s19, 0
      %p88 = por %p86, %p87
      %p89 = scmp.le.s32.totalorder 1, %s13
      %p90 = scmp.lt.s32.totalorder %s13, 3
      %p91 = pnand %p89, %p90
      %p92 = pneg %p91
      // Predicated region
      $region9: #{tpu_custom_call.1} parent=5 // pred_check
        _
      $region10: #{tpu_custom_call.1} parent=5 // pred_check_branch
        %94 = sbr.rel (%p91) target = $region12
      $region11: #{tpu_custom_call.1} parent=5 // pred_region
        %s95 = ssub.s32 %s13, 1
      $region12: #{tpu_custom_call.1} parent=5 // pred_fallthru
        _
      %p96 = scmp.lt.s32.totalorder %s13, 2
      // Predicated region
      $region13: #{tpu_custom_call.1} parent=5 // pred_check
        %p97 = pneg %p96
      $region14: #{tpu_custom_call.1} parent=5 // pred_check_branch
        %99 = sbr.rel (%p97) target = $region16
      $region15: #{tpu_custom_call.1} parent=5 // pred_region
        // Predicated region
        $region17: #{tpu_custom_call.1} parent=15 // pred_check
          %p100 = pneg %p47
        $region18: #{tpu_custom_call.1} parent=15 // pred_check_branch
          %102 = sbr.rel (%p100) target = $region20
        $region19: #{tpu_custom_call.1} parent=15 // pred_region
          %s103 = sand.u32 %s37, 1
          %s104 = scalar_lea.sflag [#allocation3], %s103
          %s105 = sand.u32 %s37, 1
          %s106 = smul.addr %s105, 16
          %s107 = scalar_lea.vmem [#allocation2], %s106
          %s108 = smul.u32 2, %s21
          %s110 = ssub.s32 256, 256
          %111 = vsyncadd %s104, %s110
          %s112 = smul.addr %s20, 2
          %s113 = sadd.s32 %s108, %s112
          %s114 = smul.addr %s113, 128
          %s115 = scalar_lea.hbm %s0, %s114
          %s116 = sshll.u32 %s107, 4
          %s117 = int_to_ptr.vmem [resolvable:$true] %s116
          %122 = dma.hbm_to_vmem [thread:$0]  %s115, 256, %s117, %s104, 128, 128, 8
        $region20: #{tpu_custom_call.1} parent=15 // pred_fallthru
          _
      $region16: #{tpu_custom_call.1} parent=5 // pred_fallthru
        _
      %p123 = scmp.le.s32.totalorder 1, %s13
      %p124 = scmp.lt.s32.totalorder %s13, 3
      %p125 = pnand %p123, %p124
      %p126 = pneg %p125
      // Predicated region
      $region21: #{tpu_custom_call.1} parent=5 // pred_check
        _
      $region22: #{tpu_custom_call.1} parent=5 // pred_check_branch
        %128 = sbr.rel (%p125) target = $region24
      $region23: #{tpu_custom_call.1} parent=5 // pred_region
        %s129 = ssub.s32 %s13, 1
        %s130 = sand.u32 %s40, 1
        %s131 = scalar_lea.sflag [#allocation3], %s130
        %s132 = sand.u32 %s40, 1
        %s133 = smul.addr %s132, 16
        %s134 = scalar_lea.vmem [#allocation2], %s133
        // Predicated region
        $region25: #{tpu_custom_call.1} parent=23 // pred_check
          %p135 = pneg %p53
        $region26: #{tpu_custom_call.1} parent=23 // pred_check_branch
          %137 = sbr.rel (%p135) target = $region28
        $region27: #{tpu_custom_call.1} parent=23 // pred_region
          %138 = dma.done %s131, 256
        $region28: #{tpu_custom_call.1} parent=23 // pred_fallthru
          _
        %s139 = sand.u32 %s40, 1
        %s140 = scalar_lea.sflag [#allocation3], %s139
        %s141 = sand.u32 %s40, 1
        %s142 = smul.addr %s141, 16
        %s143 = scalar_lea.vmem [#allocation2], %s142
        %p144 = pneg %p53
        %p145 = pneg %p50
        %p146 = pneg %p81
        %p147 = pneg %p78
        %s148 = sand.u32 %s68, 1
        %s149 = scalar_lea.sflag [#allocation4], %s148
        %s150 = sand.u32 %s68, 1
        %s151 = smul.addr %s150, 48
        %s152 = scalar_lea.vmem [#allocation5], %s151
        %s153 = smul.u32 2, %s23
        %s154 = smul.u32 2, %s23
        %v155 = vld [vmem:[%s134] sm:$0xff]
        %v156 = vld [vmem:[%s134 + $0x8] sm:$0xff]
        %vm157 = vcmask 130048
        %158 = vst.msk [vmem:[%s152] sm:$0xff] %vm157, %v155
        %159 = vst.msk [vmem:[%s152 + $0x8] sm:$0xff] %vm157, %v156
        %160 = vst.msk [vmem:[%s152 + $0x10] sm:$0xff] %vm157, %v155
        %161 = vst.msk [vmem:[%s152 + $0x18] sm:$0xff] %vm157, %v156
        %162 = vst.msk [vmem:[%s152 + $0x20] sm:$0xff] %vm157, %v155
        %163 = vst.msk [vmem:[%s152 + $0x28] sm:$0xff] %vm157, %v156
        %s164 = sand.u32 %s68, 1
        %s165 = scalar_lea.sflag [#allocation4], %s164
        %s166 = sand.u32 %s68, 1
        %s167 = smul.addr %s166, 48
        %s168 = scalar_lea.vmem [#allocation5], %s167
        // Predicated region
        $region29: #{tpu_custom_call.1} parent=23 // pred_check
          %p169 = pneg %p78
        $region30: #{tpu_custom_call.1} parent=23 // pred_check_branch
          %171 = sbr.rel (%p169) target = $region32
        $region31: #{tpu_custom_call.1} parent=23 // pred_region
          %s172 = smul.u32 2, %s23
          %s174 = ssub.s32 768, 768
          %175 = vsyncadd %s165, %s174
          %s176 = smul.addr %s22, 6
          %s177 = sadd.s32 %s172, %s176
          %s178 = smul.addr %s177, 128
          %s179 = scalar_lea.hbm %s1, %s178
          %s180 = sshll.u32 %s168, 4
          %s181 = int_to_ptr.vmem [resolvable:$true] %s180
          %186 = dma.vmem_to_hbm [thread:$0]  %s181, 768, %s179, %s165, 128, 128, 8
        $region32: #{tpu_custom_call.1} parent=23 // pred_fallthru
          _
      $region24: #{tpu_custom_call.1} parent=5 // pred_fallthru
        _
      %p187 = scmp.le.s32.totalorder 2, %s13
      // Predicated region
      $region33: #{tpu_custom_call.1} parent=5 // pred_check
        %p188 = pneg %p187
      $region34: #{tpu_custom_call.1} parent=5 // pred_check_branch
        %190 = sbr.rel (%p188) target = $region36
      $region35: #{tpu_custom_call.1} parent=5 // pred_region
        %s191 = ssub.s32 %s13, 2
        // Predicated region
        $region37: #{tpu_custom_call.1} parent=35 // pred_check
          %p192 = pneg %p84
        $region38: #{tpu_custom_call.1} parent=35 // pred_check_branch
          %194 = sbr.rel (%p192) target = $region40
        $region39: #{tpu_custom_call.1} parent=35 // pred_region
          %s195 = sand.u32 %s69, 1
          %s196 = scalar_lea.sflag [#allocation4], %s195
          %s197 = sand.u32 %s69, 1
          %s198 = smul.addr %s197, 48
          %s199 = scalar_lea.vmem [#allocation5], %s198
          %200 = dma.done %s196, 768
        $region40: #{tpu_custom_call.1} parent=35 // pred_fallthru
          _
      $region36: #{tpu_custom_call.1} parent=5 // pred_fallthru
        _
    $region6: #{tpu_custom_call.1} parent=1 // loop_footer
      %s17 = sadd.s32 1, %s13
    $region7: #{tpu_custom_call.1} parent=1 // loop_footer_branch
      %12 = sbr.rel target = $region3
    $region8: #{tpu_custom_call.1} parent=1 // loop_exit
      _
    %201 = vsyncpa [#allocation3], 1
    %s202 = scalar_lea.sflag [#allocation3], 1
    %203 = vsyncpa %s202, 1
    %204 = vsyncpa [#allocation4], 1
    %s205 = scalar_lea.sflag [#allocation4], 1
    %206 = vsyncpa %s205, 1

</llo_original>
